<compile_context>
chip_gen: v6e
topology: v6e:2x2x1
jax: 0.10.0
libtpu: 0.0.40
codegen_flags: <defaults>
</compile_context>

<pallas_src>
from functools import partial

import jax
import jax.numpy as jnp
import numpy as np
from jax import lax
from jax.experimental import pallas as pl
from jax.experimental.pallas import tpu as pltpu


def _pow(z, beta):
    """z ** beta without EUP exp/log when beta is a small integer."""
    if beta == 2.0:
        return z * z
    if float(beta).is_integer() and beta >= 1.0:
        n = int(beta)
        out = z
        for _ in range(n - 1):
            out = out * z
        return out
    return z ** beta            # general case: only hit on small (Kb, H/W) arrays


def _soft_roi_pool_kernel(rp_ref, ew_ref, eh_ref, x_ref, feat_ref, map_ref,
                          probs_sc, *, beta, H, W, norm, precise_features):
    # rp_ref  : (1, Kb, 4)   roi params (mu_x, mu_y, sigma_x, sigma_y)
    # ew_ref  : (W, Pp)      0/1 x-selector, loop-invariant resident constant
    # eh_ref  : (H, Pp)      0/1 y-selector, loop-invariant resident constant
    # x_ref   : (1, Pp, db)  flattened feature-map slice for this batch / d tile
    # feat_ref: (1, Kb, db)  pooled roi features (output)
    # map_ref : (1, Kb, Pp)  roi attention map (output; written at d_idx == 0)
    # probs_sc: (Kb, Pp) f32 probs scratch, persists across the d axis
    di = pl.program_id(2)

    @pl.when(di == 0)
    def _():
        rp = rp_ref[0].astype(jnp.float32)                    # (Kb, 4)
        mu_x, mu_y = rp[:, 0:1], rp[:, 1:2]
        # Per-roi reciprocal (Kb transcendentals) instead of Kb*(H+W) divides.
        inv_sig_x = pl.reciprocal(rp[:, 2:3], approx=False)   # (Kb, 1)
        inv_sig_y = pl.reciprocal(rp[:, 3:4], approx=False)   # (Kb, 1)

        # Sample coordinates generated in-kernel (no extra DMA).
        gx = (lax.broadcasted_iota(jnp.int32, (1, W), 1).astype(jnp.float32)
              + 0.5) * (1.0 / W)
        gy = (lax.broadcasted_iota(jnp.int32, (1, H), 1).astype(jnp.float32)
              + 0.5) * (1.0 / H)

        # Separable 1-D scores: exp over Kb*(H+W) elements only.
        # (Kept as two exps: at production H, W >= 128 each already fills the
        #  full 128-lane vreg, so lane-packing the two would gain nothing.)
        zx = jnp.abs(gx - mu_x) * inv_sig_x                   # (Kb, W)
        zy = jnp.abs(gy - mu_y) * inv_sig_y                   # (Kb, H)
        sx = jnp.exp(-_pow(zx, beta))                         # (Kb, W)
        sy = jnp.exp(-_pow(zy, beta))                         # (Kb, H)

        # Row max of the full product grid = product of the 1-D maxima (>0).
        mx = jnp.max(sx, axis=-1, keepdims=True)              # (Kb, 1)
        my = jnp.max(sy, axis=-1, keepdims=True)              # (Kb, 1)
        inv_denom = pl.reciprocal(mx * my + 1e-12, approx=False)
        sxn = sx * inv_denom                                  # fold normalizer in

        # Expand the 1-D factors onto the flattened grid with the resident
        # 0/1 selectors on the MXU.  Kept in f32 so roi_features (computed
        # from probs) retain full precision vs the reference.
        sx_full = jnp.dot(sxn, ew_ref[...], preferred_element_type=jnp.float32)
        sy_full = jnp.dot(sy, eh_ref[...], preferred_element_type=jnp.float32)
        probs = sx_full * sy_full                             # (Kb, Pp), VPU
        probs_sc[...] = probs
        map_ref[0] = probs.astype(map_ref.dtype)

    # Feature pooling for this d slice (runs every d step).
    lhs = probs_sc[...]
    if (not precise_features) and x_ref.dtype != jnp.float32:
        lhs = lhs.astype(x_ref.dtype)       # bf16 LHS doubles MXU rate
    feats = jnp.dot(lhs, x_ref[0], preferred_element_type=jnp.float32) * (1.0 / norm)
    feat_ref[0] = feats.astype(feat_ref.dtype)


def soft_roi_pool(x, roi_params, *, beta=2.0, k_block=None, d_block=None,
                  map_dtype=jnp.bfloat16, precise_features=False):
    """x: (N, H, W, d) NHWC feature map; roi_params: (N, K, 4) in [0, 1].

    k_block:  K tile (auto: largest divisor of K <= 256 that keeps blocks legal,
              split once more when the grid would otherwise have a single
              parallel step so both v7x TensorCores get work).
    d_block:  d tile (auto: shrunk in 128-multiples until the VMEM estimate
              fits the chip's capacity minus headroom).
    map_dtype: roi_map output dtype; defaults to bf16 to halve the dominant
              HBM writeback (probs stay f32 internally).
    precise_features: force the feats-matmul LHS to f32 even for bf16 x
              (parity testing).
    """
    N, H, W, d = x.shape
    _, K, _ = roi_params.shape
    P = H * W
    P_pad = ((P + 127) // 128) * 128        # lane-dense map / probs writes
    map_dtype = jnp.dtype(map_dtype)
    x_itemsize = jnp.dtype(x.dtype).itemsize

    # ---- K tile: fill MXU rows, but keep >= 2 parallel grid steps (v7x). ----
    if k_block is None:
        cands = [dv for dv in range(1, K + 1)
                 if K % dv == 0 and dv <= 256 and (dv == K or dv % 8 == 0)]
        k_block = max(cands) if cands else K
        if N * (K // k_block) < 2 and k_block % 16 == 0:
            k_block //= 2                   # give the second TensorCore work
    assert K % k_block == 0, "k_block must divide K"

    # ---- VMEM budget: tiles + in-kernel temporaries, generation-aware cap. --
    try:
        vmem_cap = int(pltpu.get_tpu_info().vmem_capacity_bytes)
    except Exception:
        vmem_cap = 64 << 20                 # conservative (v7x per-TC VMEM)
    budget = max(vmem_cap - (16 << 20), 16 << 20)

    def _vmem_estimate(db):
        est = 2 * P_pad * db * x_itemsize                     # x block (2x buf)
        est += 2 * k_block * P_pad * map_dtype.itemsize       # map out block
        est += 2 * k_block * db * x_itemsize                  # feat out block
        est += 2 * k_block * 4 * 4                            # roi params block
        est += 2 * (H + W) * P_pad * 4                        # selector constants
        est += k_block * P_pad * 4                            # probs scratch
        est += 3 * k_block * P_pad * 4                        # sx_full/sy_full/probs temps
        return est

    if d_block is None:
        d_block = d
        while (_vmem_estimate(d_block) > budget and d_block % 2 == 0
               and (d_block // 2) % 128 == 0):
            d_block //= 2
    assert d % d_block == 0 and (d_block == d or d_block % 128 == 0)

    vmem_limit_bytes = int(min(budget,
                               max(int(1.2 * _vmem_estimate(d_block)) + (2 << 20),
                                   16 << 20)))

    # ---- Host-built 0/1 selectors: loop-invariant, DMA'd once (constant block).
    p = np.arange(P)
    ew_np = np.zeros((W, P_pad), np.float32)
    ew_np[p % W, p] = 1.0
    eh_np = np.zeros((H, P_pad), np.float32)
    eh_np[p // W, p] = 1.0
    ew = jnp.asarray(ew_np)
    eh = jnp.asarray(eh_np)

    x_flat = x.reshape(N, P, d)             # free HBM reshape
    if P_pad != P:
        x_flat = jnp.pad(x_flat, ((0, 0), (0, P_pad - P), (0, 0)))

    kernel = partial(_soft_roi_pool_kernel, beta=float(beta), H=H, W=W,
                     norm=float(P), precise_features=bool(precise_features))

    # TODO(synk): when both K//k_block > 1 and d//d_block > 1, the x slice is
    # re-DMA'd per K tile; an (n, d, k) grid order with per-step probs
    # recompute would trade that HBM traffic for extra MXU work.
    grid = (N, K // k_block, d // d_block)
    roi_features, roi_map_flat = pl.pallas_call(
        kernel,
        out_shape=(
            jax.ShapeDtypeStruct((N, K, d), x.dtype),
            jax.ShapeDtypeStruct((N, K, P_pad), map_dtype),
        ),
        grid_spec=pltpu.PrefetchScalarGridSpec(
            num_scalar_prefetch=0,
            grid=grid,
            in_specs=[
                pl.BlockSpec((1, k_block, 4), lambda n, k, di: (n, k, 0)),    # roi params
                pl.BlockSpec((W, P_pad), lambda n, k, di: (0, 0)),            # ew const
                pl.BlockSpec((H, P_pad), lambda n, k, di: (0, 0)),            # eh const
                pl.BlockSpec((1, P_pad, d_block), lambda n, k, di: (n, 0, di)),  # x slice
            ],
            out_specs=[
                pl.BlockSpec((1, k_block, d_block), lambda n, k, di: (n, k, di)),  # feats
                pl.BlockSpec((1, k_block, P_pad), lambda n, k, di: (n, k, 0)),     # map
            ],
            scratch_shapes=[pltpu.VMEM((k_block, P_pad), jnp.float32)],
        ),
        compiler_params=pltpu.CompilerParams(
            dimension_semantics=("parallel", "parallel", "arbitrary"),
            vmem_limit_bytes=vmem_limit_bytes),
    )(roi_params, ew, eh, x_flat)

    roi_map = roi_map_flat[:, :, :P].reshape(N, K, H, W)
    return roi_features, roi_params, roi_map


def _reference(x, roi_params, beta=2.0):
    """Pure-JAX reference mirroring the PyTorch forward."""
    N, H, W, d = x.shape
    ys, xs = jnp.meshgrid(jnp.arange(H, dtype=x.dtype),
                          jnp.arange(W, dtype=x.dtype), indexing="ij")
    gx = ((xs + 0.5) / W).reshape(-1)
    gy = ((ys + 0.5) / H).reshape(-1)
    mu = roi_params[:, :, :2]
    sigma = roi_params[:, :, 2:]
    lx = -(jnp.abs(gx[None, None] - mu[..., 0][:, :, None])
           / sigma[..., 0][:, :, None]) ** beta
    ly = -(jnp.abs(gy[None, None] - mu[..., 1][:, :, None])
           / sigma[..., 1][:, :, None]) ** beta
    scores = jnp.exp(lx + ly)
    probs = scores / (jnp.max(scores, axis=-1, keepdims=True) + 1e-12)
    roi_map = probs.reshape(N, roi_params.shape[1], H, W)
    feats = jnp.einsum("nrf,nfd->nrd", probs, x.reshape(N, -1, d)) / (H * W)
    return feats, roi_params, roi_map


if __name__ == "__main__":
    N, H, W, d, K = 2, 16, 16, 32, 8

    key = jax.random.PRNGKey(0)
    kx, kmu, ksig = jax.random.split(key, 3)
    x = jax.random.normal(kx, (N, H, W, d), dtype=jnp.float32)
    mu = jax.random.uniform(kmu, (N, K, 2), dtype=jnp.float32)
    sigma = jax.random.uniform(ksig, (N, K, 2), dtype=jnp.float32,
                               minval=0.1, maxval=0.5)
    roi_params = jnp.concatenate([mu, sigma], axis=-1)       # (N, K, 4)

    # Default config: bf16 roi_map (halves the dominant HBM writeback).
    feats_bf, rp_out, map_bf = soft_roi_pool(x, roi_params, beta=2.0)
    jax.block_until_ready((feats_bf, rp_out, map_bf))

    # f32 roi_map for tight parity with the PyTorch reference.
    feats_f32, _, map_f32 = soft_roi_pool(x, roi_params, beta=2.0,
                                          map_dtype=jnp.float32)
    jax.block_until_ready((feats_f32, map_f32))

    ref_feat, _, ref_map = _reference(x, roi_params, beta=2.0)

    np.testing.assert_allclose(np.asarray(feats_f32), np.asarray(ref_feat),
                               rtol=1e-4, atol=1e-5)
    np.testing.assert_allclose(np.asarray(map_f32), np.asarray(ref_map),
                               rtol=1e-4, atol=1e-5)
    np.testing.assert_allclose(np.asarray(feats_bf), np.asarray(ref_feat),
                               rtol=1e-4, atol=1e-5)
    np.testing.assert_allclose(np.asarray(map_bf).astype(np.float32),
                               np.asarray(ref_map), rtol=2e-2, atol=2e-2)

    print("KERNEL_OK")
</pallas_src>

<mosaic_0001>
module attributes {stable_mosaic.version = 11 : i64} {
  func.func @_soft_roi_pool_kernel(%arg0: i32, %arg1: i32, %arg2: i32, %arg3: memref<1x8x4xf32, #tpu.memory_space<vmem>>, %arg4: memref<16x256xf32, #tpu.memory_space<vmem>>, %arg5: memref<16x256xf32, #tpu.memory_space<vmem>>, %arg6: memref<1x256x32xf32, #tpu.memory_space<vmem>>, %arg7: memref<1x8x32xf32, #tpu.memory_space<vmem>>, %arg8: memref<1x8x256xbf16, #tpu.memory_space<vmem>>, %arg9: memref<8x256xf32, #tpu.memory_space<vmem>>) attributes {dimension_semantics = [#tpu.dimension_semantics<parallel>, #tpu.dimension_semantics<parallel>, #tpu.dimension_semantics<arbitrary>], iteration_bounds = array<i64: 2, 1, 1>, scalar_prefetch = 0 : i64, scratch_operands = 1 : i64, tpu.core_type = #tpu.core_type<tc>, window_params = [{transform_indices = @transform_0, window_bounds = array<i64: 1, 8, 4>}, {pipeline_mode = #tpu.pipeline_mode<synchronous>, transform_indices = @transform_1, window_bounds = array<i64: 16, 256>}, {pipeline_mode = #tpu.pipeline_mode<synchronous>, transform_indices = @transform_2, window_bounds = array<i64: 16, 256>}, {transform_indices = @transform_3, window_bounds = array<i64: 1, 256, 32>}, {transform_indices = @transform_4, window_bounds = array<i64: 1, 8, 32>}, {transform_indices = @transform_5, window_bounds = array<i64: 1, 8, 256>}]} {
    %c0_i32 = arith.constant 0 : i32
    %0 = arith.cmpi eq, %arg2, %c0_i32 : i32
    %1 = arith.extui %0 : i1 to i32
    %c0_i32_0 = arith.constant 0 : i32
    %2 = arith.cmpi ne, %1, %c0_i32_0 : i32
    scf.if %2 {
      %c0_9 = arith.constant 0 : index
      %c0_10 = arith.constant 0 : index
      %c0_11 = arith.constant 0 : index
      %12 = vector.load %arg3[%c0_9, %c0_10, %c0_11] : memref<1x8x4xf32, #tpu.memory_space<vmem>>, vector<1x8x4xf32>
      %13 = vector.shape_cast %12 : vector<1x8x4xf32> to vector<8x4xf32>
      %14 = vector.extract_strided_slice %13 {offsets = [0, 0], sizes = [8, 1], strides = [1, 1]} : vector<8x4xf32> to vector<8x1xf32>
      %15 = vector.extract_strided_slice %13 {offsets = [0, 1], sizes = [8, 1], strides = [1, 1]} : vector<8x4xf32> to vector<8x1xf32>
      %16 = vector.extract_strided_slice %13 {offsets = [0, 2], sizes = [8, 1], strides = [1, 1]} : vector<8x4xf32> to vector<8x1xf32>
      %17 = tpu.reciprocal %16 : vector<8x1xf32> -> vector<8x1xf32>
      %18 = vector.extract_strided_slice %13 {offsets = [0, 3], sizes = [8, 1], strides = [1, 1]} : vector<8x4xf32> to vector<8x1xf32>
      %19 = tpu.reciprocal %18 : vector<8x1xf32> -> vector<8x1xf32>
      %20 = tpu.iota {dimensions = array<i32: 1>} : vector<1x16xi32>
      %21 = arith.sitofp %20 : vector<1x16xi32> to vector<1x16xf32>
      %cst_12 = arith.constant 5.000000e-01 : f32
      %22 = vector.broadcast %cst_12 : f32 to vector<1x16xf32>
      %23 = arith.addf %21, %22 : vector<1x16xf32>
      %cst_13 = arith.constant 6.250000e-02 : f32
      %24 = vector.broadcast %cst_13 : f32 to vector<1x16xf32>
      %25 = arith.mulf %23, %24 : vector<1x16xf32>
      %26 = tpu.iota {dimensions = array<i32: 1>} : vector<1x16xi32>
      %27 = arith.sitofp %26 : vector<1x16xi32> to vector<1x16xf32>
      %cst_14 = arith.constant 5.000000e-01 : f32
      %28 = vector.broadcast %cst_14 : f32 to vector<1x16xf32>
      %29 = arith.addf %27, %28 : vector<1x16xf32>
      %cst_15 = arith.constant 6.250000e-02 : f32
      %30 = vector.broadcast %cst_15 : f32 to vector<1x16xf32>
      %31 = arith.mulf %29, %30 : vector<1x16xf32>
      %32 = vector.broadcast %25 : vector<1x16xf32> to vector<8x16xf32>
      %33 = vector.broadcast %14 : vector<8x1xf32> to vector<8x16xf32>
      %34 = arith.subf %32, %33 : vector<8x16xf32>
      %35 = math.absf %34 : vector<8x16xf32>
      %36 = vector.broadcast %17 : vector<8x1xf32> to vector<8x16xf32>
      %37 = arith.mulf %35, %36 : vector<8x16xf32>
      %38 = vector.broadcast %31 : vector<1x16xf32> to vector<8x16xf32>
      %39 = vector.broadcast %15 : vector<8x1xf32> to vector<8x16xf32>
      %40 = arith.subf %38, %39 : vector<8x16xf32>
      %41 = math.absf %40 : vector<8x16xf32>
      %42 = vector.broadcast %19 : vector<8x1xf32> to vector<8x16xf32>
      %43 = arith.mulf %41, %42 : vector<8x16xf32>
      %44 = arith.mulf %37, %37 : vector<8x16xf32>
      %cst_16 = arith.constant 0.000000e+00 : f32
      %45 = vector.broadcast %cst_16 : f32 to vector<8x16xf32>
      %46 = arith.subf %45, %44 : vector<8x16xf32>
      %47 = math.exp %46 : vector<8x16xf32>
      %48 = arith.mulf %43, %43 : vector<8x16xf32>
      %cst_17 = arith.constant 0.000000e+00 : f32
      %49 = vector.broadcast %cst_17 : f32 to vector<8x16xf32>
      %50 = arith.subf %49, %48 : vector<8x16xf32>
      %51 = math.exp %50 : vector<8x16xf32>
      %cst_18 = arith.constant dense<0xFF800000> : vector<8xf32>
      %52 = vector.multi_reduction <maximumf>, %47, %cst_18 [1] : vector<8x16xf32> to vector<8xf32>
      %53 = vector.shape_cast %52 : vector<8xf32> to vector<8x1xf32>
      %cst_19 = arith.constant dense<0xFF800000> : vector<8xf32>
      %54 = vector.multi_reduction <maximumf>, %51, %cst_19 [1] : vector<8x16xf32> to vector<8xf32>
      %55 = vector.shape_cast %54 : vector<8xf32> to vector<8x1xf32>
      %56 = arith.mulf %53, %55 : vector<8x1xf32>
      %cst_20 = arith.constant 9.99999996E-13 : f32
      %57 = vector.broadcast %cst_20 : f32 to vector<8x1xf32>
      %58 = arith.addf %56, %57 : vector<8x1xf32>
      %59 = tpu.reciprocal %58 : vector<8x1xf32> -> vector<8x1xf32>
      %60 = vector.broadcast %59 : vector<8x1xf32> to vector<8x16xf32>
      %61 = arith.mulf %47, %60 : vector<8x16xf32>
      %c0_21 = arith.constant 0 : index
      %c0_22 = arith.constant 0 : index
      %62 = vector.load %arg4[%c0_21, %c0_22] : memref<16x256xf32, #tpu.memory_space<vmem>>, vector<16x256xf32>
      %cst_23 = arith.constant dense<0.000000e+00> : vector<8x256xf32>
      %63 = tpu.matmul %61, %62, %cst_23 {dimension_numbers = #tpu.dot_dimension_numbers<[1], [0], [0], [1], [0, 0, 1, 1], [], []>} : vector<8x16xf32>, vector<16x256xf32>, vector<8x256xf32> -> vector<8x256xf32>
      %c0_24 = arith.constant 0 : index
      %c0_25 = arith.constant 0 : index
      %64 = vector.load %arg5[%c0_24, %c0_25] : memref<16x256xf32, #tpu.memory_space<vmem>>, vector<16x256xf32>
      %cst_26 = arith.constant dense<0.000000e+00> : vector<8x256xf32>
      %65 = tpu.matmul %51, %64, %cst_26 {dimension_numbers = #tpu.dot_dimension_numbers<[1], [0], [0], [1], [0, 0, 1, 1], [], []>} : vector<8x16xf32>, vector<16x256xf32>, vector<8x256xf32> -> vector<8x256xf32>
      %66 = arith.mulf %63, %65 : vector<8x256xf32>
      %c0_27 = arith.constant 0 : index
      %c0_28 = arith.constant 0 : index
      %67 = vector.load %arg9[%c0_27, %c0_28] : memref<8x256xf32, #tpu.memory_space<vmem>>, vector<8x256xf32>
      tpu.vector_store %arg9[%c0_27, %c0_28], %66 {strides = array<i32>} : memref<8x256xf32, #tpu.memory_space<vmem>>, vector<8x256xf32>,
      %68 = arith.truncf %66 : vector<8x256xf32> to vector<8x256xbf16>
      %c0_29 = arith.constant 0 : index
      %c0_30 = arith.constant 0 : index
      %c0_31 = arith.constant 0 : index
      %69 = vector.load %arg8[%c0_29, %c0_30, %c0_31] : memref<1x8x256xbf16, #tpu.memory_space<vmem>>, vector<1x8x256xbf16>
      %70 = vector.shape_cast %69 : vector<1x8x256xbf16> to vector<8x256xbf16>
      %71 = vector.shape_cast %68 : vector<8x256xbf16> to vector<1x8x256xbf16>
      tpu.vector_store %arg8[%c0_29, %c0_30, %c0_31], %71 {strides = array<i32>} : memref<1x8x256xbf16, #tpu.memory_space<vmem>>, vector<1x8x256xbf16>,
    } else {
    }
    %c0 = arith.constant 0 : index
    %c0_1 = arith.constant 0 : index
    %3 = vector.load %arg9[%c0, %c0_1] : memref<8x256xf32, #tpu.memory_space<vmem>>, vector<8x256xf32>
    %c0_2 = arith.constant 0 : index
    %c0_3 = arith.constant 0 : index
    %c0_4 = arith.constant 0 : index
    %4 = vector.load %arg6[%c0_2, %c0_3, %c0_4] : memref<1x256x32xf32, #tpu.memory_space<vmem>>, vector<1x256x32xf32>
    %5 = vector.shape_cast %4 : vector<1x256x32xf32> to vector<256x32xf32>
    %cst = arith.constant dense<0.000000e+00> : vector<8x32xf32>
    %6 = tpu.matmul %3, %5, %cst {dimension_numbers = #tpu.dot_dimension_numbers<[1], [0], [0], [1], [0, 0, 1, 1], [], []>} : vector<8x256xf32>, vector<256x32xf32>, vector<8x32xf32> -> vector<8x32xf32>
    %cst_5 = arith.constant 3.906250e-03 : f32
    %7 = vector.broadcast %cst_5 : f32 to vector<8x32xf32>
    %8 = arith.mulf %6, %7 : vector<8x32xf32>
    %c0_6 = arith.constant 0 : index
    %c0_7 = arith.constant 0 : index
    %c0_8 = arith.constant 0 : index
    %9 = vector.load %arg7[%c0_6, %c0_7, %c0_8] : memref<1x8x32xf32, #tpu.memory_space<vmem>>, vector<1x8x32xf32>
    %10 = vector.shape_cast %9 : vector<1x8x32xf32> to vector<8x32xf32>
    %11 = vector.shape_cast %8 : vector<8x32xf32> to vector<1x8x32xf32>
    tpu.vector_store %arg7[%c0_6, %c0_7, %c0_8], %11 {strides = array<i32>} : memref<1x8x32xf32, #tpu.memory_space<vmem>>, vector<1x8x32xf32>,
    return
  }
  func.func @transform_0(%arg0: i32, %arg1: i32, %arg2: i32) -> (i32, i32, i32) {
    %c0_i32 = arith.constant 0 : i32
    %c0_i32_0 = arith.constant 0 : i32
    return %arg0, %arg1, %c0_i32 : i32, i32, i32
  }
  func.func @transform_1(%arg0: i32, %arg1: i32, %arg2: i32) -> (i32, i32) {
    %c0_i32 = arith.constant 0 : i32
    %c0_i32_0 = arith.constant 0 : i32
    %c0_i32_1 = arith.constant 0 : i32
    return %c0_i32, %c0_i32_0 : i32, i32
  }
  func.func @transform_2(%arg0: i32, %arg1: i32, %arg2: i32) -> (i32, i32) {
    %c0_i32 = arith.constant 0 : i32
    %c0_i32_0 = arith.constant 0 : i32
    %c0_i32_1 = arith.constant 0 : i32
    return %c0_i32, %c0_i32_0 : i32, i32
  }
  func.func @transform_3(%arg0: i32, %arg1: i32, %arg2: i32) -> (i32, i32, i32) {
    %c0_i32 = arith.constant 0 : i32
    %c0_i32_0 = arith.constant 0 : i32
    return %arg0, %c0_i32, %arg2 : i32, i32, i32
  }
  func.func @transform_4(%arg0: i32, %arg1: i32, %arg2: i32) -> (i32, i32, i32) {
    %c0_i32 = arith.constant 0 : i32
    return %arg0, %arg1, %arg2 : i32, i32, i32
  }
  func.func @transform_5(%arg0: i32, %arg1: i32, %arg2: i32) -> (i32, i32, i32) {
    %c0_i32 = arith.constant 0 : i32
    %c0_i32_0 = arith.constant 0 : i32
    return %arg0, %arg1, %c0_i32 : i32, i32, i32
  }
}

</mosaic_0001>

<llo_original>
// kernel: tpu_custom_call.1
$region0: #{tpu_custom_call.1}
  #allocation0 [shape = 'u32[]', space=smem, size = 0x4, offset = 0x4, fixed_abs, tag = 'smem constant byte address 0x4 - core index']
  #allocation1 [shape = 'u32[144,128]{1,0:T(1,128)}', space=vmem, size = 0x12000, scoped, tag = 'internal scratch']
  #allocation2 [shape = 'f32[8,256]{1,0:T(8,128)}', space=vmem, size = 0x2000, scoped, tag = 'scratch operand']
  %s0 = inlined_call_operand.vmem [shape: f32[2,8,4], index: 0, kind: input, shape index: {}]
  %s1 = inlined_call_operand.vmem [shape: f32[16,256], index: 1, kind: input, shape index: {}]
  %s2 = inlined_call_operand.vmem [shape: f32[16,256], index: 2, kind: input, shape index: {}]
  %s3 = inlined_call_operand.vmem [shape: f32[2,256,32], index: 3, kind: input, shape index: {}]
  %s4 = inlined_call_operand.hbm [shape: f32[2,8,32], index: 4, kind: output, shape index: {0}]
  %s5 = inlined_call_operand.hbm [shape: bf16[2,8,256], index: 5, kind: output, shape index: {1}]
  %6 = xla_tuple %s4, %s5
  %s7 = sld [smem:[#allocation0]]
  $region61: #{tpu_custom_call.1} parent=0
    _
  %s9 = ssub.s32 1, %s7
  %s10 = scalar_select 0, %s9, %s7
  $region1: #{tpu_custom_call.1} parent=0
    #allocation3 [shape = 'u8[8192]{0}', space=vmem, size = 0x2000, scoped, tag = 'output window, operand 0']
    #allocation4 [shape = 's32[2]{0}', space=sflag, size = 0x8, scoped, tag = 'scoped memory for tpu_custom_call.1']
    #allocation5 [shape = 'u8[8192]{0}', space=vmem, size = 0x2000, scoped, tag = 'output window, operand 1']
    #allocation6 [shape = 's32[2]{0}', space=sflag, size = 0x8, scoped, tag = 'scoped memory for tpu_custom_call.1']
    %11 = vsyncpa [#allocation4], 0
    %s12 = scalar_lea.sflag [#allocation4], 1
    %13 = vsyncpa %s12, 0
    %14 = vsyncpa [#allocation6], 0
    %s15 = scalar_lea.sflag [#allocation6], 1
    %16 = vsyncpa %s15, 0
    loop: start=0, step=1, limit=4
    $region2: #{tpu_custom_call.1} parent=1 // loop_pre_header
      _
    $region3: #{tpu_custom_call.1} parent=1 // loop_header
      %s18 = sphi 0, %s22
      %p19 = scmp.ge.s32.totalorder %s18, 4
      %s25 = sphi 0, %s44
      %s26 = sphi 0, %s40
      %s27 = sphi 0, %s36
      %s28 = sphi 0, %s25
      %s29 = sphi 0, %s26
      %s30 = sphi 0, %s27
      %s31 = sphi 0, %s28
      %s32 = sphi 0, %s29
      %s33 = sphi 0, %s30
      %s49 = sphi 0, %s51
      %s52 = sphi 0, %s49
      %s53 = sphi 0, %s52
      %s69 = sphi 0, %s53
      %s73 = sphi 0, %s73
      %s75 = sphi 0, %s73
      %s76 = sphi 0, %s75
      %s90 = sphi 0, %s76
      %s94 = sphi 0, %s94
      %s96 = sphi 0, %s94
      %s97 = sphi 0, %s96
      %s111 = sphi 0, %s97
      %s119 = sphi 0, %s121
      %s122 = sphi 0, %s119
      %s123 = sphi 0, %s122
      %s139 = sphi 0, %s123
      %s149 = sphi 0, %s151
      %s152 = sphi 0, %s149
      %s153 = sphi 0, %s152
      %s169 = sphi 0, %s153
      %s177 = sphi 0, %s179
      %s180 = sphi 0, %s177
      %s181 = sphi 0, %s180
      %s197 = sphi 0, %s181
    $region4: #{tpu_custom_call.1} parent=1 // loop_header_branch
      %21 = sbr.rel (%p19) target = $region8
    $region5: #{tpu_custom_call.1} parent=1 // loop_body
      %s23 = ssub.s32 %s18, 1
      %s24 = ssub.s32 %s18, 2
      %s34 = sadd.s32 1, %s27
      %p35 = scmp.ge.s32.totalorder %s34, 1
      %s36 = scalar_select %p35, 0, %s34
      %s37 = sadd.s32 1, %s26
      %s38 = scalar_select %p35, %s37, %s26
      %p39 = scmp.ge.s32.totalorder %s38, 1
      %s40 = scalar_select %p39, 0, %s38
      %s41 = sadd.s32 1, %s25
      %s42 = scalar_select %p39, %s41, %s25
      %p43 = scmp.ge.s32.totalorder %s42, 2
      %s44 = scalar_select %p43, 0, %s42
      %s45 = ssub.s32 %s25, %s44
      %s46 = ssub.s32 %s26, %s40
      %s47 = sor.u32 %s45, %s46
      %p48 = scmp.eq.s32.totalorder %s47, 0
      %s50 = sadd.s32 %s49, 1
      %s51 = scalar_select %p48, %s49, %s50
      %p54 = pneg %p48
      %p55 = scmp.eq.s32.totalorder %s18, 1
      %p56 = por %p54, %p55
      %p57 = scmp.ne.s32.totalorder %s49, %s52
      %p58 = scmp.eq.s32.totalorder %s18, 0
      %p59 = por %p57, %p58
      %p60 = scmp.ne.s32.totalorder %s49, %s52
      %p61 = scmp.eq.s32.totalorder %s23, 1
      %p62 = por %p60, %p61
      %p63 = scmp.ne.s32.totalorder %s52, %s53
      %p64 = scmp.eq.s32.totalorder %s23, 0
      %p65 = por %p63, %p64
      %p66 = scmp.ne.s32.totalorder %s52, %s53
      %p67 = scmp.eq.s32.totalorder %s24, 1
      %p68 = por %p66, %p67
      %p70 = scmp.ne.s32.totalorder %s53, %s69
      %p71 = scmp.eq.s32.totalorder %s24, 0
      %p72 = por %p70, %p71
      %s74 = sadd.s32 %s73, 1
      %p77 = scmp.eq.s32.totalorder %s18, 1
      %p78 = scmp.ne.s32.totalorder %s73, %s75
      %p79 = scmp.eq.s32.totalorder %s18, 0
      %p80 = por %p78, %p79
      %p81 = scmp.ne.s32.totalorder %s73, %s75
      %p82 = scmp.eq.s32.totalorder %s23, 1
      %p83 = por %p81, %p82
      %p84 = scmp.ne.s32.totalorder %s75, %s76
      %p85 = scmp.eq.s32.totalorder %s23, 0
      %p86 = por %p84, %p85
      %p87 = scmp.ne.s32.totalorder %s75, %s76
      %p88 = scmp.eq.s32.totalorder %s24, 1
      %p89 = por %p87, %p88
      %p91 = scmp.ne.s32.totalorder %s76, %s90
      %p92 = scmp.eq.s32.totalorder %s24, 0
      %p93 = por %p91, %p92
      %s95 = sadd.s32 %s94, 1
      %p98 = scmp.eq.s32.totalorder %s18, 1
      %p99 = scmp.ne.s32.totalorder %s94, %s96
      %p100 = scmp.eq.s32.totalorder %s18, 0
      %p101 = por %p99, %p100
      %p102 = scmp.ne.s32.totalorder %s94, %s96
      %p103 = scmp.eq.s32.totalorder %s23, 1
      %p104 = por %p102, %p103
      %p105 = scmp.ne.s32.totalorder %s96, %s97
      %p106 = scmp.eq.s32.totalorder %s23, 0
      %p107 = por %p105, %p106
      %p108 = scmp.ne.s32.totalorder %s96, %s97
      %p109 = scmp.eq.s32.totalorder %s24, 1
      %p110 = por %p108, %p109
      %p112 = scmp.ne.s32.totalorder %s97, %s111
      %p113 = scmp.eq.s32.totalorder %s24, 0
      %p114 = por %p112, %p113
      %s115 = ssub.s32 %s25, %s44
      %s116 = ssub.s32 %s27, %s36
      %s117 = sor.u32 %s115, %s116
      %p118 = scmp.eq.s32.totalorder %s117, 0
      %s120 = sadd.s32 %s119, 1
      %s121 = scalar_select %p118, %s119, %s120
      %p124 = pneg %p118
      %p125 = scmp.eq.s32.totalorder %s18, 1
      %p126 = por %p124, %p125
      %p127 = scmp.ne.s32.totalorder %s119, %s122
      %p128 = scmp.eq.s32.totalorder %s18, 0
      %p129 = por %p127, %p128
      %p130 = scmp.ne.s32.totalorder %s119, %s122
      %p131 = scmp.eq.s32.totalorder %s23, 1
      %p132 = por %p130, %p131
      %p133 = scmp.ne.s32.totalorder %s122, %s123
      %p134 = scmp.eq.s32.totalorder %s23, 0
      %p135 = por %p133, %p134
      %p136 = scmp.ne.s32.totalorder %s122, %s123
      %p137 = scmp.eq.s32.totalorder %s24, 1
      %p138 = por %p136, %p137
      %p140 = scmp.ne.s32.totalorder %s123, %s139
      %p141 = scmp.eq.s32.totalorder %s24, 0
      %p142 = por %p140, %p141
      %s143 = ssub.s32 %s25, %s44
      %s144 = ssub.s32 %s26, %s40
      %s145 = sor.u32 %s143, %s144
      %s146 = ssub.s32 %s27, %s36
      %s147 = sor.u32 %s145, %s146
      %p148 = scmp.eq.s32.totalorder %s147, 0
      %s150 = sadd.s32 %s149, 1
      %s151 = scalar_select %p148, %s149, %s150
      %p154 = pneg %p148
      %p155 = scmp.eq.s32.totalorder %s18, 1
      %p156 = por %p154, %p155
      %p157 = scmp.ne.s32.totalorder %s149, %s152
      %p158 = scmp.eq.s32.totalorder %s18, 0
      %p159 = por %p157, %p158
      %p160 = scmp.ne.s32.totalorder %s149, %s152
      %p161 = scmp.eq.s32.totalorder %s23, 1
      %p162 = por %p160, %p161
      %p163 = scmp.ne.s32.totalorder %s152, %s153
      %p164 = scmp.eq.s32.totalorder %s23, 0
      %p165 = por %p163, %p164
      %p166 = scmp.ne.s32.totalorder %s152, %s153
      %p167 = scmp.eq.s32.totalorder %s24, 1
      %p168 = por %p166, %p167
      %p170 = scmp.ne.s32.totalorder %s153, %s169
      %p171 = scmp.eq.s32.totalorder %s24, 0
      %p172 = por %p170, %p171
      %s173 = ssub.s32 %s25, %s44
      %s174 = ssub.s32 %s26, %s40
      %s175 = sor.u32 %s173, %s174
      %p176 = scmp.eq.s32.totalorder %s175, 0
      %s178 = sadd.s32 %s177, 1
      %s179 = scalar_select %p176, %s177, %s178
      %p182 = pneg %p176
      %p183 = scmp.eq.s32.totalorder %s18, 1
      %p184 = por %p182, %p183
      %p185 = scmp.ne.s32.totalorder %s177, %s180
      %p186 = scmp.eq.s32.totalorder %s18, 0
      %p187 = por %p185, %p186
      %p188 = scmp.ne.s32.totalorder %s177, %s180
      %p189 = scmp.eq.s32.totalorder %s23, 1
      %p190 = por %p188, %p189
      %p191 = scmp.ne.s32.totalorder %s180, %s181
      %p192 = scmp.eq.s32.totalorder %s23, 0
      %p193 = por %p191, %p192
      %p194 = scmp.ne.s32.totalorder %s180, %s181
      %p195 = scmp.eq.s32.totalorder %s24, 1
      %p196 = por %p194, %p195
      %p198 = scmp.ne.s32.totalorder %s181, %s197
      %p199 = scmp.eq.s32.totalorder %s24, 0
      %p200 = por %p198, %p199
      %p201 = scmp.le.s32.totalorder 1, %s18
      %p202 = scmp.lt.s32.totalorder %s18, 3
      %p203 = pnand %p201, %p202
      %p204 = pneg %p203
      // Predicated region
      $region9: #{tpu_custom_call.1} parent=5 // pred_check
        _
      $region10: #{tpu_custom_call.1} parent=5 // pred_check_branch
        %206 = sbr.rel (%p203) target = $region12
      $region11: #{tpu_custom_call.1} parent=5 // pred_region
        %s207 = ssub.s32 %s18, 1
        // Predicated region
        $region13: #{tpu_custom_call.1} parent=11 // pred_check
          %p208 = pneg %p86
        $region14: #{tpu_custom_call.1} parent=11 // pred_check_branch
          %210 = sbr.rel (%p208) target = $region16
        $region15: #{tpu_custom_call.1} parent=11 // pred_region
          _
        $region16: #{tpu_custom_call.1} parent=11 // pred_fallthru
          _
        // Predicated region
        $region17: #{tpu_custom_call.1} parent=11 // pred_check
          %p211 = pneg %p107
        $region18: #{tpu_custom_call.1} parent=11 // pred_check_branch
          %213 = sbr.rel (%p211) target = $region20
        $region19: #{tpu_custom_call.1} parent=11 // pred_region
          _
        $region20: #{tpu_custom_call.1} parent=11 // pred_fallthru
          _
      $region12: #{tpu_custom_call.1} parent=5 // pred_fallthru
        _
      %p214 = scmp.lt.s32.totalorder %s18, 2
      // Predicated region
      $region21: #{tpu_custom_call.1} parent=5 // pred_check
        %p215 = pneg %p214
      $region22: #{tpu_custom_call.1} parent=5 // pred_check_branch
        %217 = sbr.rel (%p215) target = $region24
      $region23: #{tpu_custom_call.1} parent=5 // pred_region
        // Predicated region
        $region25: #{tpu_custom_call.1} parent=23 // pred_check
          %p218 = pneg %p59
        $region26: #{tpu_custom_call.1} parent=23 // pred_check_branch
          %220 = sbr.rel (%p218) target = $region28
        $region27: #{tpu_custom_call.1} parent=23 // pred_region
          %p221 = scmp.lt.s32.totalorder %s25, 1
          %s222 = scalar_select %p221, %s25, 1
          %p223 = scmp.lt.s32.totalorder %s26, 0
          %s224 = scalar_select %p223, %s26, 0
          %s225 = sadd.s32 %s224, %s222
          %s226 = smul.addr %s225, 8
          %s227 = scalar_lea.vmem %s0, %s226
        $region28: #{tpu_custom_call.1} parent=23 // pred_fallthru
          _
        // Predicated region
        $region29: #{tpu_custom_call.1} parent=23 // pred_check
          %p228 = pneg %p129
        $region30: #{tpu_custom_call.1} parent=23 // pred_check_branch
          %230 = sbr.rel (%p228) target = $region32
        $region31: #{tpu_custom_call.1} parent=23 // pred_region
          %p231 = scmp.lt.s32.totalorder %s25, 1
          %s232 = scalar_select %p231, %s25, 1
          %p233 = scmp.lt.s32.totalorder %s27, 0
          %s234 = scalar_select %p233, %s27, 0
          %s235 = smul.addr %s232, 32
          %s236 = sadd.s32 %s234, %s235
          %s237 = smul.addr %s236, 8
          %s238 = scalar_lea.vmem %s3, %s237
        $region32: #{tpu_custom_call.1} parent=23 // pred_fallthru
          _
      $region24: #{tpu_custom_call.1} parent=5 // pred_fallthru
        _
      %p239 = scmp.le.s32.totalorder 1, %s18
      %p240 = scmp.lt.s32.totalorder %s18, 3
      %p241 = pnand %p239, %p240
      %p242 = pneg %p241
      // Predicated region
      $region33: #{tpu_custom_call.1} parent=5 // pred_check
        _
      $region34: #{tpu_custom_call.1} parent=5 // pred_check_branch
        %244 = sbr.rel (%p241) target = $region36
      $region35: #{tpu_custom_call.1} parent=5 // pred_region
        %s245 = ssub.s32 %s18, 1
        %p246 = scmp.lt.s32.totalorder %s28, 1
        %s247 = scalar_select %p246, %s28, 1
        %p248 = scmp.lt.s32.totalorder %s29, 0
        %s249 = scalar_select %p248, %s29, 0
        %s250 = sadd.s32 %s249, %s247
        %s251 = smul.addr %s250, 8
        %s252 = scalar_lea.vmem %s0, %s251
        %p253 = pneg %p65
        %p254 = pneg %p62
        %p255 = pneg %p86
        %p256 = pneg %p83
        %p257 = pneg %p107
        %p258 = pneg %p104
        %p259 = scmp.lt.s32.totalorder %s28, 1
        %s260 = scalar_select %p259, %s28, 1
        %p261 = scmp.lt.s32.totalorder %s30, 0
        %s262 = scalar_select %p261, %s30, 0
        %s263 = smul.addr %s260, 32
        %s264 = sadd.s32 %s262, %s263
        %s265 = smul.addr %s264, 8
        %s266 = scalar_lea.vmem %s3, %s265
        %p267 = pneg %p135
        %p268 = pneg %p132
        %p269 = pneg %p165
        %p270 = pneg %p162
        %s271 = sand.u32 %s152, 1
        %s272 = scalar_lea.sflag [#allocation4], %s271
        %s273 = sand.u32 %s152, 1
        %s274 = smul.addr %s273, 8
        %s275 = scalar_lea.vmem [#allocation3], %s274
        %p276 = pneg %p193
        %p277 = pneg %p190
        %s278 = sand.u32 %s180, 1
        %s279 = scalar_lea.sflag [#allocation6], %s278
        %s280 = sand.u32 %s180, 1
        %s281 = smul.addr %s280, 8
        %s282 = scalar_lea.vmem [#allocation5], %s281
        %p283 = scmp.lt.s32.totalorder %s28, 1
        %s284 = scalar_select %p283, %s28, 1
        %p285 = scmp.lt.s32.totalorder %s29, 0
        %s286 = scalar_select %p285, %s29, 0
        %s287 = sadd.s32 %s286, %s284
        %s288 = smul.addr %s287, 8
        %s289 = scalar_lea.vmem %s0, %s288
        %p290 = scmp.lt.s32.totalorder %s28, 1
        %s291 = scalar_select %p290, %s28, 1
        %p292 = scmp.lt.s32.totalorder %s30, 0
        %s293 = scalar_select %p292, %s30, 0
        %s294 = smul.addr %s291, 32
        %s295 = sadd.s32 %s293, %s294
        %s296 = smul.addr %s295, 8
        %s297 = scalar_lea.vmem %s3, %s296
        %p298 = scmp.eq.s32.totalorder %s30, 0
        // Predicated region
        $region37: #{tpu_custom_call.1} parent=35 // pred_check
          %p299 = pneg %p298
        $region38: #{tpu_custom_call.1} parent=35 // pred_check_branch
          %301 = sbr.rel (%p299) target = $region40
        $region39: #{tpu_custom_call.1} parent=35 // pred_region
          %v302 = vld [vmem:[%s289] sm:$0xff]
          %v303 = vrcp.pop %v302
          %v304 = vlaneseq
          %v305 = vand.u32 %v304, 127
          %v306 = vcvt.s32.f32 %v305
          %v307 = vadd.f32 %v306, 0.5
          %v308 = vmul.f32 %v307, 0.0625
          %310 = vset.pattern.permute.xlu0 0
          %311 = vperm.xlu0 %310, %v302
          %v312 = vpop.permute.xlu0 %311
          %v314 = vsub.f32 %v308, %v312
          %v315 = vand.u32 2147483647, %v314
          %317 = vset.pattern.permute.xlu0 2
          %318 = vperm.xlu0 %317, %v303
          %v319 = vpop.permute.xlu0 %318
          %v321 = vmul.f32 %v315, %v319
          %322 = vset.pattern.permute.xlu0 1
          %323 = vperm.xlu0 %322, %v302
          %v324 = vpop.permute.xlu0 %323
          %v326 = vsub.f32 %v308, %v324
          %v327 = vand.u32 2147483647, %v326
          %328 = vset.pattern.permute.xlu0 3
          %329 = vperm.xlu0 %328, %v303
          %v330 = vpop.permute.xlu0 %329
          %v332 = vmul.f32 %v327, %v330
          %v333 = vmul.f32 %v321, %v321
          %v334 = vsub.f32 0.0, %v333
          %v335 = vmul.f32 %v334, 1.442695
          %v336 = vpow.pop %v335
          %v337 = vmul.f32 %v332, %v332
          %v338 = vsub.f32 0.0, %v337
          %v339 = vmul.f32 %v338, 1.442695
          %v340 = vpow.pop %v339
          %vm341 = vcmask 130048
          %v342 = vsel %vm341, %v336, -inf
          %343 = vmax.xlane.f32.xlu0 %v342
          %v344 = vpop.xlane.xlu0 %343
          %v345 = vsel %vm341, %v340, -inf
          %346 = vmax.xlane.f32.xlu0 %v345
          %v347 = vpop.xlane.xlu0 %346
          %v348 = vmul.f32 %v344, %v347
          %v349 = vadd.f32 %v348, 1e-12
          %v350 = vrcp.pop %v349
          %v351 = vmul.f32 %v336, %v350
          %v352 = vld [vmem:[%s1] sm:$0xff]
          %v353 = vld [vmem:[%s1 + $0x8] sm:$0xff]
          %v354 = vld [vmem:[%s1 + $0x10] sm:$0xff]
          %v355 = vld [vmem:[%s1 + $0x18] sm:$0xff]
          %v357 = vsel %vm341, %v351, 0
          %359 = vmatprep.subr.mxu0 0.0
          %360 = vmatpush1.msra.mxu0 0.0
          %361 = vmatprep.subr.mxu0 0.0
          %362 = vmatpush1.msra.mxu0 0.0
          %363 = vmatprep.subr.mxu0 0.0
          %364 = vmatpush1.msra.mxu0 0.0
          %365 = vmatprep.subr.mxu0 0.0
          %366 = vmatpush1.msra.mxu0 0.0
          %367 = vmatprep.subr.mxu0 0.0
          %368 = vmatpush1.msra.mxu0 0.0
          %369 = vmatprep.subr.mxu0 0.0
          %370 = vmatpush1.msra.mxu0 0.0
          %371 = vmatprep.subr.mxu0 0.0
          %372 = vmatpush1.msra.mxu0 0.0
          %373 = vmatprep.subr.mxu0 0.0
          %374 = vmatpush1.msra.mxu0 0.0
          %375 = vmatprep.subr.mxu0 0.0
          %376 = vmatpush1.msra.mxu0 0.0
          %377 = vmatprep.subr.mxu0 0.0
          %378 = vmatpush1.msra.mxu0 0.0
          %379 = vmatprep.subr.mxu0 0.0
          %380 = vmatpush1.msra.mxu0 0.0
          %381 = vmatprep.subr.mxu0 0.0
          %382 = vmatpush1.msra.mxu0 0.0
          %383 = vmatprep.subr.mxu0 0.0
          %384 = vmatpush1.msra.mxu0 0.0
          %385 = vmatprep.subr.mxu0 0.0
          %386 = vmatpush1.msra.mxu0 0.0
          %387 = vmatprep.subr.mxu0 %v355
          %388 = vmatpush1.msra.mxu0 %v354
          %389 = vmatprep.subr.mxu0 %v353
          %390 = vmatpush1.msra.mxu0 %v352
          %391 = vmatprep.subr.mxu0 0.0
          %392 = vmatpush2.msra.mxu0 0.0
          %393 = vmatprep.subr.mxu0 0.0
          %394 = vmatpush2.msra.mxu0 0.0
          %395 = vmatprep.subr.mxu0 0.0
          %396 = vmatpush2.msra.mxu0 0.0
          %397 = vmatprep.subr.mxu0 0.0
          %398 = vmatpush2.msra.mxu0 0.0
          %399 = vmatprep.subr.mxu0 0.0
          %400 = vmatpush2.msra.mxu0 0.0
          %401 = vmatprep.subr.mxu0 0.0
          %402 = vmatpush2.msra.mxu0 0.0
          %403 = vmatprep.subr.mxu0 0.0
          %404 = vmatpush2.msra.mxu0 0.0
          %405 = vmatprep.subr.mxu0 0.0
          %406 = vmatpush2.msra.mxu0 0.0
          %407 = vmatprep.subr.mxu0 0.0
          %408 = vmatpush2.msra.mxu0 0.0
          %409 = vmatprep.subr.mxu0 0.0
          %410 = vmatpush2.msra.mxu0 0.0
          %411 = vmatprep.subr.mxu0 0.0
          %412 = vmatpush2.msra.mxu0 0.0
          %413 = vmatprep.subr.mxu0 0.0
          %414 = vmatpush2.msra.mxu0 0.0
          %415 = vmatprep.subr.mxu0 0.0
          %416 = vmatpush2.msra.mxu0 0.0
          %417 = vmatprep.subr.mxu0 0.0
          %418 = vmatpush2.msra.mxu0 0.0
          %419 = vmatprep.subr.mxu0 0.0
          %420 = vmatpush2.msra.mxu0 0.0
          %421 = vmatprep.subr.mxu0 0.0
          %422 = vmatpush2.msra.mxu0 0.0
          %423 = vmatprep.mubr.f32.mxu0 0.0
          %424 = vmatmul.mubr.f32.gmra.mxu0 %v357
          %v425 = vpop.f32.mrf.mxu0
          %v426 = vadd.f32 0.0, %v425
          %v427 = vpop.f32.mrf.mxu0
          %v428 = vadd.f32 0.0, %v427
          %429 = vdwg.mxu0
          %v430 = vld [vmem:[%s2] sm:$0xff]
          %v431 = vld [vmem:[%s2 + $0x8] sm:$0xff]
          %v432 = vld [vmem:[%s2 + $0x10] sm:$0xff]
          %v433 = vld [vmem:[%s2 + $0x18] sm:$0xff]
          %v435 = vsel %vm341, %v340, 0
          %437 = vmatprep.subr.mxu0 0.0
          %438 = vmatpush1.msra.mxu0 0.0
          %439 = vmatprep.subr.mxu0 0.0
          %440 = vmatpush1.msra.mxu0 0.0
          %441 = vmatprep.subr.mxu0 0.0
          %442 = vmatpush1.msra.mxu0 0.0
          %443 = vmatprep.subr.mxu0 0.0
          %444 = vmatpush1.msra.mxu0 0.0
          %445 = vmatprep.subr.mxu0 0.0
          %446 = vmatpush1.msra.mxu0 0.0
          %447 = vmatprep.subr.mxu0 0.0
          %448 = vmatpush1.msra.mxu0 0.0
          %449 = vmatprep.subr.mxu0 0.0
          %450 = vmatpush1.msra.mxu0 0.0
          %451 = vmatprep.subr.mxu0 0.0
          %452 = vmatpush1.msra.mxu0 0.0
          %453 = vmatprep.subr.mxu0 0.0
          %454 = vmatpush1.msra.mxu0 0.0
          %455 = vmatprep.subr.mxu0 0.0
          %456 = vmatpush1.msra.mxu0 0.0
          %457 = vmatprep.subr.mxu0 0.0
          %458 = vmatpush1.msra.mxu0 0.0
          %459 = vmatprep.subr.mxu0 0.0
          %460 = vmatpush1.msra.mxu0 0.0
          %461 = vmatprep.subr.mxu0 0.0
          %462 = vmatpush1.msra.mxu0 0.0
          %463 = vmatprep.subr.mxu0 0.0
          %464 = vmatpush1.msra.mxu0 0.0
          %465 = vmatprep.subr.mxu0 %v433
          %466 = vmatpush1.msra.mxu0 %v432
          %467 = vmatprep.subr.mxu0 %v431
          %468 = vmatpush1.msra.mxu0 %v430
          %469 = vmatprep.subr.mxu0 0.0
          %470 = vmatpush2.msra.mxu0 0.0
          %471 = vmatprep.subr.mxu0 0.0
          %472 = vmatpush2.msra.mxu0 0.0
          %473 = vmatprep.subr.mxu0 0.0
          %474 = vmatpush2.msra.mxu0 0.0
          %475 = vmatprep.subr.mxu0 0.0
          %476 = vmatpush2.msra.mxu0 0.0
          %477 = vmatprep.subr.mxu0 0.0
          %478 = vmatpush2.msra.mxu0 0.0
          %479 = vmatprep.subr.mxu0 0.0
          %480 = vmatpush2.msra.mxu0 0.0
          %481 = vmatprep.subr.mxu0 0.0
          %482 = vmatpush2.msra.mxu0 0.0
          %483 = vmatprep.subr.mxu0 0.0
          %484 = vmatpush2.msra.mxu0 0.0
          %485 = vmatprep.subr.mxu0 0.0
          %486 = vmatpush2.msra.mxu0 0.0
          %487 = vmatprep.subr.mxu0 0.0
          %488 = vmatpush2.msra.mxu0 0.0
          %489 = vmatprep.subr.mxu0 0.0
          %490 = vmatpush2.msra.mxu0 0.0
          %491 = vmatprep.subr.mxu0 0.0
          %492 = vmatpush2.msra.mxu0 0.0
          %493 = vmatprep.subr.mxu0 0.0
          %494 = vmatpush2.msra.mxu0 0.0
          %495 = vmatprep.subr.mxu0 0.0
          %496 = vmatpush2.msra.mxu0 0.0
          %497 = vmatprep.subr.mxu0 0.0
          %498 = vmatpush2.msra.mxu0 0.0
          %499 = vmatprep.subr.mxu0 0.0
          %500 = vmatpush2.msra.mxu0 0.0
          %501 = vmatprep.mubr.f32.mxu0 0.0
          %502 = vmatmul.mubr.f32.gmra.mxu0 %v435
          %v503 = vpop.f32.mrf.mxu0
          %v504 = vadd.f32 0.0, %v503
          %v505 = vpop.f32.mrf.mxu0
          %v506 = vadd.f32 0.0, %v505
          %507 = vdwg.mxu0
          %v508 = vmul.f32 %v426, %v504
          %v509 = vmul.f32 %v428, %v506
          %510 = vst [vmem:[#allocation2] sm:$0xff] %v508
          %511 = vst [vmem:[#allocation2 + $0x8] sm:$0xff] %v509
          %v512 = vpack.c.bf16 %v508, %v508
          %v513 = vpack.c.bf16 %v509, %v509
          %v516 = vunpack.c.l.b16 %v512
          %v517 = vunpack.c.l.b16 %v513
          %v518 = vpack.c.b16 %v517, %v516
          %520 = vst [vmem:[%s282] sm:$0xff] %v518
        $region40: #{tpu_custom_call.1} parent=35 // pred_fallthru
          _
        %v521 = vld [vmem:[#allocation2] sm:$0xff]
        %v522 = vld [vmem:[#allocation2 + $0x8] sm:$0xff]
        %v523 = vld [vmem:[%s297] sm:$0xff]
        %v524 = vld [vmem:[%s297 + $0x8] sm:$0xff]
        %v525 = vld [vmem:[%s297 + $0x10] sm:$0xff]
        %v526 = vld [vmem:[%s297 + $0x18] sm:$0xff]
        %v527 = vld [vmem:[%s297 + $0x20] sm:$0xff]
        %v528 = vld [vmem:[%s297 + $0x28] sm:$0xff]
        %v529 = vld [vmem:[%s297 + $0x30] sm:$0xff]
        %v530 = vld [vmem:[%s297 + $0x38] sm:$0xff]
        %v531 = vld [vmem:[%s297 + $0x40] sm:$0xff]
        %v532 = vld [vmem:[%s297 + $0x48] sm:$0xff]
        %v533 = vld [vmem:[%s297 + $0x50] sm:$0xff]
        %v534 = vld [vmem:[%s297 + $0x58] sm:$0xff]
        %v535 = vld [vmem:[%s297 + $0x60] sm:$0xff]
        %v536 = vld [vmem:[%s297 + $0x68] sm:$0xff]
        %v537 = vld [vmem:[%s297 + $0x70] sm:$0xff]
        %v538 = vld [vmem:[%s297 + $0x78] sm:$0xff]
        %v539 = vld [vmem:[%s297 + $0x80] sm:$0xff]
        %v540 = vld [vmem:[%s297 + $0x88] sm:$0xff]
        %v541 = vld [vmem:[%s297 + $0x90] sm:$0xff]
        %v542 = vld [vmem:[%s297 + $0x98] sm:$0xff]
        %v543 = vld [vmem:[%s297 + $0xa0] sm:$0xff]
        %v544 = vld [vmem:[%s297 + $0xa8] sm:$0xff]
        %v545 = vld [vmem:[%s297 + $0xb0] sm:$0xff]
        %v546 = vld [vmem:[%s297 + $0xb8] sm:$0xff]
        %v547 = vld [vmem:[%s297 + $0xc0] sm:$0xff]
        %v548 = vld [vmem:[%s297 + $0xc8] sm:$0xff]
        %v549 = vld [vmem:[%s297 + $0xd0] sm:$0xff]
        %v550 = vld [vmem:[%s297 + $0xd8] sm:$0xff]
        %v551 = vld [vmem:[%s297 + $0xe0] sm:$0xff]
        %v552 = vld [vmem:[%s297 + $0xe8] sm:$0xff]
        %v553 = vld [vmem:[%s297 + $0xf0] sm:$0xff]
        %v554 = vld [vmem:[%s297 + $0xf8] sm:$0xff]
        %555 = vmatprep.subr.mxu0 0.0
        %556 = vmatpush1.msra.mxu0 %v538
        %557 = vmatprep.subr.mxu0 0.0
        %558 = vmatpush1.msra.mxu0 %v537
        %559 = vmatprep.subr.mxu0 0.0
        %560 = vmatpush1.msra.mxu0 %v536
        %561 = vmatprep.subr.mxu0 0.0
        %562 = vmatpush1.msra.mxu0 %v535
        %563 = vmatprep.subr.mxu0 0.0
        %564 = vmatpush1.msra.mxu0 %v534
        %565 = vmatprep.subr.mxu0 0.0
        %566 = vmatpush1.msra.mxu0 %v533
        %567 = vmatprep.subr.mxu0 0.0
        %568 = vmatpush1.msra.mxu0 %v532
        %569 = vmatprep.subr.mxu0 0.0
        %570 = vmatpush1.msra.mxu0 %v531
        %571 = vmatprep.subr.mxu0 0.0
        %572 = vmatpush1.msra.mxu0 %v530
        %573 = vmatprep.subr.mxu0 0.0
        %574 = vmatpush1.msra.mxu0 %v529
        %575 = vmatprep.subr.mxu0 0.0
        %576 = vmatpush1.msra.mxu0 %v528
        %577 = vmatprep.subr.mxu0 0.0
        %578 = vmatpush1.msra.mxu0 %v527
        %579 = vmatprep.subr.mxu0 0.0
        %580 = vmatpush1.msra.mxu0 %v526
        %581 = vmatprep.subr.mxu0 0.0
        %582 = vmatpush1.msra.mxu0 %v525
        %583 = vmatprep.subr.mxu0 0.0
        %584 = vmatpush1.msra.mxu0 %v524
        %585 = vmatprep.subr.mxu0 0.0
        %586 = vmatpush1.msra.mxu0 %v523
        %587 = vmatprep.subr.mxu0 0.0
        %588 = vmatpush2.msra.mxu0 %v554
        %589 = vmatprep.subr.mxu0 0.0
        %590 = vmatpush2.msra.mxu0 %v553
        %591 = vmatprep.subr.mxu0 0.0
        %592 = vmatpush2.msra.mxu0 %v552
        %593 = vmatprep.subr.mxu0 0.0
        %594 = vmatpush2.msra.mxu0 %v551
        %595 = vmatprep.subr.mxu0 0.0
        %596 = vmatpush2.msra.mxu0 %v550
        %597 = vmatprep.subr.mxu0 0.0
        %598 = vmatpush2.msra.mxu0 %v549
        %599 = vmatprep.subr.mxu0 0.0
        %600 = vmatpush2.msra.mxu0 %v548
        %601 = vmatprep.subr.mxu0 0.0
        %602 = vmatpush2.msra.mxu0 %v547
        %603 = vmatprep.subr.mxu0 0.0
        %604 = vmatpush2.msra.mxu0 %v546
        %605 = vmatprep.subr.mxu0 0.0
        %606 = vmatpush2.msra.mxu0 %v545
        %607 = vmatprep.subr.mxu0 0.0
        %608 = vmatpush2.msra.mxu0 %v544
        %609 = vmatprep.subr.mxu0 0.0
        %610 = vmatpush2.msra.mxu0 %v543
        %611 = vmatprep.subr.mxu0 0.0
        %612 = vmatpush2.msra.mxu0 %v542
        %613 = vmatprep.subr.mxu0 0.0
        %614 = vmatpush2.msra.mxu0 %v541
        %615 = vmatprep.subr.mxu0 0.0
        %616 = vmatpush2.msra.mxu0 %v540
        %617 = vmatprep.subr.mxu0 0.0
        %618 = vmatpush2.msra.mxu0 %v539
        %619 = vmatprep.mubr.f32.mxu0 %v522
        %620 = vmatmul.mubr.f32.gmra.mxu0 %v521
        %v621 = vpop.f32.mrf.mxu0
        %v622 = vadd.f32 0.0, %v621
        %v623 = vpop.f32.mrf.mxu0
        %624 = vdwg.mxu0
        %v625 = vmul.f32 %v622, 0.00390625
        %vm626 = vcmask 261120
        %627 = vst.msk [vmem:[%s275] sm:$0xff] %vm626, %v625
        %s628 = sand.u32 %s152, 1
        %s629 = scalar_lea.sflag [#allocation4], %s628
        %s630 = sand.u32 %s152, 1
        %s631 = smul.addr %s630, 8
        %s632 = scalar_lea.vmem [#allocation3], %s631
        %s633 = sand.u32 %s180, 1
        %s634 = scalar_lea.sflag [#allocation6], %s633
        %s635 = sand.u32 %s180, 1
        %s636 = smul.addr %s635, 8
        %s637 = scalar_lea.vmem [#allocation5], %s636
        // Predicated region
        $region41: #{tpu_custom_call.1} parent=35 // pred_check
          %p638 = pneg %p162
        $region42: #{tpu_custom_call.1} parent=35 // pred_check_branch
          %640 = sbr.rel (%p638) target = $region44
        $region43: #{tpu_custom_call.1} parent=35 // pred_region
          %s642 = ssub.s32 128, 128
          %643 = vsyncadd %s629, %s642
          %s644 = sadd.s32 %s30, %s29
          %s645 = sadd.s32 %s644, %s28
          %s646 = smul.addr %s645, 128
          %s647 = scalar_lea.hbm %s4, %s646
          %s649 = sshll.u32 %s632, 4
          %s650 = int_to_ptr.vmem [resolvable:$true] %s649
          %652 = dma.vmem_to_hbm [thread:$0]  %s650, 128, %s647, %s629
        $region44: #{tpu_custom_call.1} parent=35 // pred_fallthru
          _
        // Predicated region
        $region45: #{tpu_custom_call.1} parent=35 // pred_check
          %p653 = pneg %p190
        $region46: #{tpu_custom_call.1} parent=35 // pred_check_branch
          %655 = sbr.rel (%p653) target = $region48
        $region47: #{tpu_custom_call.1} parent=35 // pred_region
          %s657 = ssub.s32 128, 128
          %658 = vsyncadd %s634, %s657
          %s659 = smul.addr %s29, 2
          %s660 = smul.addr %s28, 2
          %s661 = sadd.s32 %s659, %s660
          %s662 = smul.addr %s661, 64
          %s663 = scalar_lea.hbm %s5, %s662
          %s665 = sshll.u32 %s637, 4
          %s666 = int_to_ptr.vmem [resolvable:$true] %s665
          %668 = dma.vmem_to_hbm [thread:$0]  %s666, 128, %s663, %s634
        $region48: #{tpu_custom_call.1} parent=35 // pred_fallthru
          _
      $region36: #{tpu_custom_call.1} parent=5 // pred_fallthru
        _
      %p669 = scmp.le.s32.totalorder 2, %s18
      // Predicated region
      $region49: #{tpu_custom_call.1} parent=5 // pred_check
        %p670 = pneg %p669
      $region50: #{tpu_custom_call.1} parent=5 // pred_check_branch
        %672 = sbr.rel (%p670) target = $region52
      $region51: #{tpu_custom_call.1} parent=5 // pred_region
        %s673 = ssub.s32 %s18, 2
        // Predicated region
        $region53: #{tpu_custom_call.1} parent=51 // pred_check
          %p674 = pneg %p168
        $region54: #{tpu_custom_call.1} parent=51 // pred_check_branch
          %676 = sbr.rel (%p674) target = $region56
        $region55: #{tpu_custom_call.1} parent=51 // pred_region
          %s677 = sand.u32 %s153, 1
          %s678 = scalar_lea.sflag [#allocation4], %s677
          %s679 = sand.u32 %s153, 1
          %s680 = smul.addr %s679, 8
          %s681 = scalar_lea.vmem [#allocation3], %s680
          %682 = dma.done %s678, 128
        $region56: #{tpu_custom_call.1} parent=51 // pred_fallthru
          _
        // Predicated region
        $region57: #{tpu_custom_call.1} parent=51 // pred_check
          %p683 = pneg %p196
        $region58: #{tpu_custom_call.1} parent=51 // pred_check_branch
          %685 = sbr.rel (%p683) target = $region60
        $region59: #{tpu_custom_call.1} parent=51 // pred_region
          %s686 = sand.u32 %s181, 1
          %s687 = scalar_lea.sflag [#allocation6], %s686
          %s688 = sand.u32 %s181, 1
          %s689 = smul.addr %s688, 8
          %s690 = scalar_lea.vmem [#allocation5], %s689
          %691 = dma.done %s687, 128
        $region60: #{tpu_custom_call.1} parent=51 // pred_fallthru
          _
      $region52: #{tpu_custom_call.1} parent=5 // pred_fallthru
        _
    $region6: #{tpu_custom_call.1} parent=1 // loop_footer
      %s22 = sadd.s32 1, %s18
    $region7: #{tpu_custom_call.1} parent=1 // loop_footer_branch
      %17 = sbr.rel target = $region3
    $region8: #{tpu_custom_call.1} parent=1 // loop_exit
      _
    %692 = vsyncpa [#allocation4], 1
    %s693 = scalar_lea.sflag [#allocation4], 1
    %694 = vsyncpa %s693, 1
    %695 = vsyncpa [#allocation6], 1
    %s696 = scalar_lea.sflag [#allocation6], 1
    %697 = vsyncpa %s696, 1

</llo_original>
